<compile_context>
chip_gen: v7x
topology: tpu7x:2x2x1
jax: 0.10.0
libtpu: 0.0.40
codegen_flags: <defaults>
</compile_context>

<pallas_src>
import numpy as np
import jax
import jax.numpy as jnp
from jax.experimental import pallas as pl
from jax.experimental.pallas import tpu as pltpu


N_OUT = 1
LANE = 128   # padded feature width: full vreg lane width / native MXU tile
BATCH = 8    # one full sublane group


# ----------------------------------------------------------------------------
# Layer-size generation (deterministic reproduction of generate_layers /
# generate_modules from the reference script).
# ----------------------------------------------------------------------------
def generate_layers(n_in, n_out, n_layers, rng):
    layers_size = {-1: n_in}
    for i in range(n_layers - 1):
        if layers_size[i - 1] <= 1:
            break
        layers_size[i] = int(rng.randint(n_out, layers_size[i - 1]))
    layers_size[len(layers_size) - 1] = n_out
    return layers_size


def generate_module_shapes(layers_size):
    """Return [(in_features, out_features), ...] per Linear layer."""
    shapes = []
    for i in sorted(k for k in layers_size.keys() if k != -1):
        shapes.append((layers_size[i - 1], layers_size[i]))
    return shapes


# ----------------------------------------------------------------------------
# Fused Pallas kernel: h = x; for each layer: h = relu(h @ W_l + b_l)
# All operands are full-array VMEM blocks; the layer loop is unrolled at trace
# time so the activation stays in vregs/VMEM between layers.
# ----------------------------------------------------------------------------
def _make_fused_mlp_kernel(n_layers):
    def kernel(x_ref, w_ref, b_ref, o_ref):
        h = x_ref[...]                                   # [B, LANE] f32
        for l in range(n_layers):                        # static unroll
            w = w_ref[l]                                 # [LANE, LANE] bf16
            b = b_ref[l]                                 # [B, LANE] f32 (pre-broadcast)
            h = jnp.dot(h.astype(jnp.bfloat16), w,
                        preferred_element_type=jnp.float32)
            h = jnp.maximum(h + b, 0.0)                  # bias + ReLU in f32
        o_ref[...] = h.astype(o_ref.dtype)
    return kernel


def fused_mlp(x_pad, w_stack, b_stack):
    """x_pad: [B, LANE] f32; w_stack: [L, LANE, LANE] bf16; b_stack: [L, B, LANE] f32."""
    B = x_pad.shape[0]
    n_layers = w_stack.shape[0]

    flops = 2 * B * LANE * LANE * n_layers
    bytes_accessed = (x_pad.size * 4 + w_stack.size * 2 + b_stack.size * 4
                      + B * LANE * 4)

    vmem_spec = pl.BlockSpec(memory_space=pltpu.MemorySpace.VMEM)
    return pl.pallas_call(
        _make_fused_mlp_kernel(n_layers),
        out_shape=jax.ShapeDtypeStruct((B, LANE), jnp.float32),
        in_specs=[vmem_spec, vmem_spec, vmem_spec],
        out_specs=vmem_spec,
        cost_estimate=pl.CostEstimate(
            flops=flops, transcendentals=0, bytes_accessed=bytes_accessed),
    )(x_pad, w_stack, b_stack)


# ----------------------------------------------------------------------------
# One-time parameter packing (host-side, outside the per-call path):
# zero-pad to LANE, stack over layers, pre-broadcast bias over the batch.
# ----------------------------------------------------------------------------
def pack_params(params, batch):
    """params: list of (W[in,out], b[out]) f32 -> (W_stack bf16, b_stack f32)."""
    n_layers = len(params)
    w_stack = np.zeros((n_layers, LANE, LANE), np.float32)
    b_stack = np.zeros((n_layers, batch, LANE), np.float32)
    for l, (w, b) in enumerate(params):
        din, dout = w.shape
        w_stack[l, :din, :dout] = np.asarray(w)
        b_stack[l, :, :dout] = np.asarray(b)[None, :]
    return jnp.asarray(w_stack, jnp.bfloat16), jnp.asarray(b_stack, jnp.float32)


# ----------------------------------------------------------------------------
# Net forward pass (tiny input pad + fused kernel + final squeeze)
# ----------------------------------------------------------------------------
@jax.jit
def net_forward(x, w_stack, b_stack):
    B, din0 = x.shape
    x_pad = jnp.zeros((B, LANE), jnp.float32).at[:, :din0].set(x)
    y = fused_mlp(x_pad, w_stack, b_stack)
    # PyTorch: x.squeeze(1) -> final out_features == 1 lives in lane 0.
    return y[:, 0]


def init_params(key, layer_shapes, dtype=jnp.float32):
    """Deterministic nn.Linear-style init: U(-1/sqrt(fan_in), 1/sqrt(fan_in))."""
    params = []
    for (din, dout) in layer_shapes:
        key, kw, kb = jax.random.split(key, 3)
        bound = 1.0 / float(np.sqrt(din))
        w = jax.random.uniform(kw, (din, dout), dtype, minval=-bound, maxval=bound)
        b = jax.random.uniform(kb, (dout,), dtype, minval=-bound, maxval=bound)
        params.append((w, b))
    return params


if __name__ == "__main__":
    # Deterministic architecture generation (stand-in for the random,
    # train_data-dependent sizes in the original script).
    n_in = 32
    rng = np.random.RandomState(0)
    n_layers = int(rng.randint(4, 10))
    layers_size = generate_layers(n_in, N_OUT, n_layers, rng)
    layer_shapes = generate_module_shapes(layers_size)
    assert layer_shapes[-1][1] == N_OUT, \
        "final layer must have out_features == 1 for x.squeeze(1)"

    # Deterministic parameters + input.
    key = jax.random.PRNGKey(0)
    key, kp, kx = jax.random.split(key, 3)
    params = init_params(kp, layer_shapes)

    # One-time packing (hoisted out of the forward path).
    w_stack, b_stack = pack_params(params, BATCH)

    x = jax.random.normal(kx, (BATCH, n_in), jnp.float32)

    out = net_forward(x, w_stack, b_stack)
    out = jax.block_until_ready(out)

    # Reference with the SAME numerics (bf16 multiplies, f32 accumulate,
    # f32 bias+ReLU) on the unpadded module.
    ref = x
    for (w, b) in params:
        ref = jnp.maximum(
            jnp.dot(ref.astype(jnp.bfloat16), w.astype(jnp.bfloat16),
                    preferred_element_type=jnp.float32) + b,
            0.0)
    ref = ref[:, 0]
    np.testing.assert_allclose(np.asarray(out), np.asarray(ref),
                               rtol=1e-4, atol=1e-4)

    # Loose sanity check against the pure-f32 reference (bf16 rounding only).
    ref32 = x
    for (w, b) in params:
        ref32 = jnp.maximum(ref32 @ w + b, 0.0)
    ref32 = ref32[:, 0]
    np.testing.assert_allclose(np.asarray(out), np.asarray(ref32),
                               rtol=5e-2, atol=5e-2)

    assert out.shape == (BATCH,)
    print("KERNEL_OK")
</pallas_src>

<mosaic_0001>
module attributes {stable_mosaic.version = 11 : i64} {
  func.func @kernel(%arg0: memref<8x128xf32, #tpu.memory_space<vmem>>, %arg1: memref<4x128x128xbf16, #tpu.memory_space<vmem>>, %arg2: memref<4x8x128xf32, #tpu.memory_space<vmem>>, %arg3: memref<8x128xf32, #tpu.memory_space<vmem>>) attributes {dimension_semantics = [], scalar_prefetch = 0 : i64, scratch_operands = 0 : i64, tpu.core_type = #tpu.core_type<tc>} {
    %c0 = arith.constant 0 : index
    %c0_0 = arith.constant 0 : index
    %0 = vector.load %arg0[%c0, %c0_0] : memref<8x128xf32, #tpu.memory_space<vmem>>, vector<8x128xf32>
    %c0_1 = arith.constant 0 : index
    %c0_2 = arith.constant 0 : index
    %c0_3 = arith.constant 0 : index
    %1 = vector.load %arg1[%c0_1, %c0_2, %c0_3] : memref<4x128x128xbf16, #tpu.memory_space<vmem>>, vector<1x128x128xbf16>
    %2 = vector.shape_cast %1 : vector<1x128x128xbf16> to vector<128x128xbf16>
    %c0_4 = arith.constant 0 : index
    %c0_5 = arith.constant 0 : index
    %c0_6 = arith.constant 0 : index
    %3 = vector.load %arg2[%c0_4, %c0_5, %c0_6] : memref<4x8x128xf32, #tpu.memory_space<vmem>>, vector<1x8x128xf32>
    %4 = vector.shape_cast %3 : vector<1x8x128xf32> to vector<8x128xf32>
    %5 = arith.truncf %0 : vector<8x128xf32> to vector<8x128xbf16>
    %cst = arith.constant dense<0.000000e+00> : vector<8x128xf32>
    %6 = tpu.matmul %5, %2, %cst {dimension_numbers = #tpu.dot_dimension_numbers<[1], [0], [0], [1], [0, 0, 1, 1], [], []>} : vector<8x128xbf16>, vector<128x128xbf16>, vector<8x128xf32> -> vector<8x128xf32>
    %7 = arith.addf %6, %4 : vector<8x128xf32>
    %cst_7 = arith.constant 0.000000e+00 : f32
    %8 = vector.broadcast %cst_7 : f32 to vector<8x128xf32>
    %9 = arith.maximumf %7, %8 : vector<8x128xf32>
    %c1 = arith.constant 1 : index
    %c0_8 = arith.constant 0 : index
    %c0_9 = arith.constant 0 : index
    %10 = vector.load %arg1[%c1, %c0_8, %c0_9] : memref<4x128x128xbf16, #tpu.memory_space<vmem>>, vector<1x128x128xbf16>
    %11 = vector.shape_cast %10 : vector<1x128x128xbf16> to vector<128x128xbf16>
    %c1_10 = arith.constant 1 : index
    %c0_11 = arith.constant 0 : index
    %c0_12 = arith.constant 0 : index
    %12 = vector.load %arg2[%c1_10, %c0_11, %c0_12] : memref<4x8x128xf32, #tpu.memory_space<vmem>>, vector<1x8x128xf32>
    %13 = vector.shape_cast %12 : vector<1x8x128xf32> to vector<8x128xf32>
    %14 = arith.truncf %9 : vector<8x128xf32> to vector<8x128xbf16>
    %cst_13 = arith.constant dense<0.000000e+00> : vector<8x128xf32>
    %15 = tpu.matmul %14, %11, %cst_13 {dimension_numbers = #tpu.dot_dimension_numbers<[1], [0], [0], [1], [0, 0, 1, 1], [], []>} : vector<8x128xbf16>, vector<128x128xbf16>, vector<8x128xf32> -> vector<8x128xf32>
    %16 = arith.addf %15, %13 : vector<8x128xf32>
    %cst_14 = arith.constant 0.000000e+00 : f32
    %17 = vector.broadcast %cst_14 : f32 to vector<8x128xf32>
    %18 = arith.maximumf %16, %17 : vector<8x128xf32>
    %c2 = arith.constant 2 : index
    %c0_15 = arith.constant 0 : index
    %c0_16 = arith.constant 0 : index
    %19 = vector.load %arg1[%c2, %c0_15, %c0_16] : memref<4x128x128xbf16, #tpu.memory_space<vmem>>, vector<1x128x128xbf16>
    %20 = vector.shape_cast %19 : vector<1x128x128xbf16> to vector<128x128xbf16>
    %c2_17 = arith.constant 2 : index
    %c0_18 = arith.constant 0 : index
    %c0_19 = arith.constant 0 : index
    %21 = vector.load %arg2[%c2_17, %c0_18, %c0_19] : memref<4x8x128xf32, #tpu.memory_space<vmem>>, vector<1x8x128xf32>
    %22 = vector.shape_cast %21 : vector<1x8x128xf32> to vector<8x128xf32>
    %23 = arith.truncf %18 : vector<8x128xf32> to vector<8x128xbf16>
    %cst_20 = arith.constant dense<0.000000e+00> : vector<8x128xf32>
    %24 = tpu.matmul %23, %20, %cst_20 {dimension_numbers = #tpu.dot_dimension_numbers<[1], [0], [0], [1], [0, 0, 1, 1], [], []>} : vector<8x128xbf16>, vector<128x128xbf16>, vector<8x128xf32> -> vector<8x128xf32>
    %25 = arith.addf %24, %22 : vector<8x128xf32>
    %cst_21 = arith.constant 0.000000e+00 : f32
    %26 = vector.broadcast %cst_21 : f32 to vector<8x128xf32>
    %27 = arith.maximumf %25, %26 : vector<8x128xf32>
    %c3 = arith.constant 3 : index
    %c0_22 = arith.constant 0 : index
    %c0_23 = arith.constant 0 : index
    %28 = vector.load %arg1[%c3, %c0_22, %c0_23] : memref<4x128x128xbf16, #tpu.memory_space<vmem>>, vector<1x128x128xbf16>
    %29 = vector.shape_cast %28 : vector<1x128x128xbf16> to vector<128x128xbf16>
    %c3_24 = arith.constant 3 : index
    %c0_25 = arith.constant 0 : index
    %c0_26 = arith.constant 0 : index
    %30 = vector.load %arg2[%c3_24, %c0_25, %c0_26] : memref<4x8x128xf32, #tpu.memory_space<vmem>>, vector<1x8x128xf32>
    %31 = vector.shape_cast %30 : vector<1x8x128xf32> to vector<8x128xf32>
    %32 = arith.truncf %27 : vector<8x128xf32> to vector<8x128xbf16>
    %cst_27 = arith.constant dense<0.000000e+00> : vector<8x128xf32>
    %33 = tpu.matmul %32, %29, %cst_27 {dimension_numbers = #tpu.dot_dimension_numbers<[1], [0], [0], [1], [0, 0, 1, 1], [], []>} : vector<8x128xbf16>, vector<128x128xbf16>, vector<8x128xf32> -> vector<8x128xf32>
    %34 = arith.addf %33, %31 : vector<8x128xf32>
    %cst_28 = arith.constant 0.000000e+00 : f32
    %35 = vector.broadcast %cst_28 : f32 to vector<8x128xf32>
    %36 = arith.maximumf %34, %35 : vector<8x128xf32>
    %c0_29 = arith.constant 0 : index
    %c0_30 = arith.constant 0 : index
    %37 = vector.load %arg3[%c0_29, %c0_30] : memref<8x128xf32, #tpu.memory_space<vmem>>, vector<8x128xf32>
    tpu.vector_store %arg3[%c0_29, %c0_30], %36 {strides = array<i32>} : memref<8x128xf32, #tpu.memory_space<vmem>>, vector<8x128xf32>,
    return
  }
}

</mosaic_0001>

<llo_original>
// kernel: net_forward.1
$region0: #{net_forward.1}
  #allocation0 [shape = 'u32[]', space=smem, size = 0x4, offset = 0x4, fixed_abs, tag = 'smem constant byte address 0x4 - core index']
  #allocation1 [shape = 'u32[144,128]{1,0:T(1,128)}', space=vmem, size = 0x12000, scoped, tag = 'internal scratch']
  %s0 = inlined_call_operand.vmem [shape: f32[8,128], index: 0, kind: input, shape index: {}]
  %s1 = inlined_call_operand.hbm [shape: bf16[4,128,128], index: 1, kind: input, shape index: {}]
  %s2 = inlined_call_operand.vmem [shape: f32[4,8,128], index: 2, kind: input, shape index: {}]
  %s3 = inlined_call_operand.vmem [shape: f32[8,128], index: 3, kind: output, shape index: {}]
  %s4 = sld [smem:[#allocation0]]
  $region26: #{net_forward.1} parent=0
    _
  %s6 = ssub.s32 1, %s4
  %s7 = scalar_select 0, %s6, %s4
  $region1: #{net_forward.1} parent=0
    #allocation2 [shape = 'u8[131072]{0}', space=vmem, size = 0x20000, scoped, tag = 'input window, operand 1, single buffered']
    #allocation3 [shape = 's32[1]{0}', space=sflag, size = 0x4, scoped, tag = 'scoped memory for net_forward.1']
    %8 = vsyncpa [#allocation3], 0
    // Predicated region
    $region2: #{net_forward.1} parent=1 // pred_check
      _
    $region3: #{net_forward.1} parent=1 // pred_check_branch
      %10 = sbr.rel (0) target = $region5
    $region4: #{net_forward.1} parent=1 // pred_region
      _
    $region5: #{net_forward.1} parent=1 // pred_fallthru
      _
    // Predicated region
    $region6: #{net_forward.1} parent=1 // pred_check
      _
    $region7: #{net_forward.1} parent=1 // pred_check_branch
      %12 = sbr.rel (0) target = $region9
    $region8: #{net_forward.1} parent=1 // pred_region
      %s14 = ssub.s32 4096, 4096
      %15 = vsyncadd [#allocation3], %s14
      %s16 = sshll.u32 [#allocation2], 4
      %s17 = int_to_ptr.vmem [resolvable:$true] %s16
      %22 = dma.hbm_to_vmem [thread:$0]  %s1, 4096, %s17, [#allocation3], 64, 64, 4
    $region9: #{net_forward.1} parent=1 // pred_fallthru
      _
    // Predicated region
    $region10: #{net_forward.1} parent=1 // pred_check
      _
    $region11: #{net_forward.1} parent=1 // pred_check_branch
      %24 = sbr.rel (0) target = $region13
    $region12: #{net_forward.1} parent=1 // pred_region
      _
    $region13: #{net_forward.1} parent=1 // pred_fallthru
      _
    // Predicated region
    $region14: #{net_forward.1} parent=1 // pred_check
      _
    $region15: #{net_forward.1} parent=1 // pred_check_branch
      %26 = sbr.rel (0) target = $region17
    $region16: #{net_forward.1} parent=1 // pred_region
      %27 = dma.done [#allocation3], 4096
    $region17: #{net_forward.1} parent=1 // pred_fallthru
      _
    %v29 = vld [vmem:[%s0] sm:$0xff]
    %v30 = vld [vmem:[#allocation2] sm:$0xf]
    %v31 = vld [vmem:[#allocation2 + $0x4] sm:$0xf]
    %v32 = vld [vmem:[#allocation2 + $0x8] sm:$0xf]
    %v33 = vld [vmem:[#allocation2 + $0xc] sm:$0xf]
    %v34 = vld [vmem:[#allocation2 + $0x10] sm:$0xf]
    %v35 = vld [vmem:[#allocation2 + $0x14] sm:$0xf]
    %v36 = vld [vmem:[#allocation2 + $0x18] sm:$0xf]
    %v37 = vld [vmem:[#allocation2 + $0x1c] sm:$0xf]
    %v38 = vld [vmem:[#allocation2 + $0x20] sm:$0xf]
    %v39 = vld [vmem:[#allocation2 + $0x24] sm:$0xf]
    %v40 = vld [vmem:[#allocation2 + $0x28] sm:$0xf]
    %v41 = vld [vmem:[#allocation2 + $0x2c] sm:$0xf]
    %v42 = vld [vmem:[#allocation2 + $0x30] sm:$0xf]
    %v43 = vld [vmem:[#allocation2 + $0x34] sm:$0xf]
    %v44 = vld [vmem:[#allocation2 + $0x38] sm:$0xf]
    %v45 = vld [vmem:[#allocation2 + $0x3c] sm:$0xf]
    %v46 = vld [vmem:[%s2] sm:$0xff]
    %v47 = vpack.c.bf16 %v29, %v29
    %v64 = vunpack.c.l.b16 %v30
    %v65 = vunpack.c.l.b16 %v31
    %v66 = vunpack.c.l.b16 %v32
    %v67 = vunpack.c.l.b16 %v33
    %v68 = vunpack.c.l.b16 %v34
    %v69 = vunpack.c.l.b16 %v35
    %v70 = vunpack.c.l.b16 %v36
    %v71 = vunpack.c.l.b16 %v37
    %v72 = vunpack.c.l.b16 %v38
    %v73 = vunpack.c.l.b16 %v39
    %v74 = vunpack.c.l.b16 %v40
    %v75 = vunpack.c.l.b16 %v41
    %v76 = vunpack.c.l.b16 %v42
    %v77 = vunpack.c.l.b16 %v43
    %v78 = vunpack.c.l.b16 %v44
    %v79 = vunpack.c.l.b16 %v45
    %v80 = vpack.c.b16 %v65, %v64
    %v81 = vpack.c.b16 %v67, %v66
    %v82 = vpack.c.b16 %v69, %v68
    %v83 = vpack.c.b16 %v71, %v70
    %v84 = vpack.c.b16 %v73, %v72
    %v85 = vpack.c.b16 %v75, %v74
    %v86 = vpack.c.b16 %v77, %v76
    %v87 = vpack.c.b16 %v79, %v78
    %96 = vmatprep.subr.bf16.mxu0 0
    %97 = vmatpush1.bf16.msra.mxu0 %v80
    %98 = vmatprep.subr.bf16.mxu0 0
    %99 = vmatpush1.bf16.msra.mxu0 %v81
    %100 = vmatprep.subr.bf16.mxu0 0
    %101 = vmatpush1.bf16.msra.mxu0 %v82
    %102 = vmatprep.subr.bf16.mxu0 0
    %103 = vmatpush1.bf16.msra.mxu0 %v83
    %104 = vmatprep.subr.bf16.mxu0 0
    %105 = vmatpush1.bf16.msra.mxu0 %v84
    %106 = vmatprep.subr.bf16.mxu0 0
    %107 = vmatpush1.bf16.msra.mxu0 %v85
    %108 = vmatprep.subr.bf16.mxu0 0
    %109 = vmatpush1.bf16.msra.mxu0 %v86
    %110 = vmatprep.subr.bf16.mxu0 0
    %111 = vmatpush1.bf16.msra.mxu0 %v87
    %112 = vmatprep.subr.bf16.mxu0 0
    %113 = vmatpush1.bf16.msra.mxu0 0
    %114 = vmatprep.subr.bf16.mxu0 0
    %115 = vmatpush1.bf16.msra.mxu0 0
    %116 = vmatprep.subr.bf16.mxu0 0
    %117 = vmatpush1.bf16.msra.mxu0 0
    %118 = vmatprep.subr.bf16.mxu0 0
    %119 = vmatpush1.bf16.msra.mxu0 0
    %120 = vmatprep.subr.bf16.mxu0 0
    %121 = vmatpush1.bf16.msra.mxu0 0
    %122 = vmatprep.subr.bf16.mxu0 0
    %123 = vmatpush1.bf16.msra.mxu0 0
    %124 = vmatprep.subr.bf16.mxu0 0
    %125 = vmatpush1.bf16.msra.mxu0 0
    %126 = vmatprep.subr.bf16.mxu0 0
    %127 = vmatpush1.bf16.msra.mxu0 0
    %128 = vmatprep.mubr.bf16.mxu0 0
    %129 = vmatmul.mubr.bf16.gmra.mrb[0].mxu0 %v47
    %v130 = vpop.f32.mrb[0].mxu0
    %v131 = vadd.f32 %v46, %v130
    %v132 = vpop.f32.mrb[0].mxu0
    %v133 = vpop.f32.mrb[0].mxu0
    %v134 = vpop.f32.mrb[0].mxu0
    %135 = vdwg.mxu0
    %v136 = vmax.f32 %v131, 0.0
    %s137 = scalar_lea.vmem [#allocation2], 64
    %v138 = vld [vmem:[%s137] sm:$0xf]
    %v139 = vld [vmem:[%s137 + $0x4] sm:$0xf]
    %v140 = vld [vmem:[%s137 + $0x8] sm:$0xf]
    %v141 = vld [vmem:[%s137 + $0xc] sm:$0xf]
    %v142 = vld [vmem:[%s137 + $0x10] sm:$0xf]
    %v143 = vld [vmem:[%s137 + $0x14] sm:$0xf]
    %v144 = vld [vmem:[%s137 + $0x18] sm:$0xf]
    %v145 = vld [vmem:[%s137 + $0x1c] sm:$0xf]
    %v146 = vld [vmem:[%s137 + $0x20] sm:$0xf]
    %v147 = vld [vmem:[%s137 + $0x24] sm:$0xf]
    %v148 = vld [vmem:[%s137 + $0x28] sm:$0xf]
    %v149 = vld [vmem:[%s137 + $0x2c] sm:$0xf]
    %v150 = vld [vmem:[%s137 + $0x30] sm:$0xf]
    %v151 = vld [vmem:[%s137 + $0x34] sm:$0xf]
    %v152 = vld [vmem:[%s137 + $0x38] sm:$0xf]
    %v153 = vld [vmem:[%s137 + $0x3c] sm:$0xf]
    %s154 = scalar_lea.vmem %s2, 8
    %v155 = vld [vmem:[%s154] sm:$0xff]
    %v156 = vpack.c.bf16 %v136, %v136
    %v173 = vunpack.c.l.b16 %v138
    %v174 = vunpack.c.l.b16 %v139
    %v175 = vunpack.c.l.b16 %v140
    %v176 = vunpack.c.l.b16 %v141
    %v177 = vunpack.c.l.b16 %v142
    %v178 = vunpack.c.l.b16 %v143
    %v179 = vunpack.c.l.b16 %v144
    %v180 = vunpack.c.l.b16 %v145
    %v181 = vunpack.c.l.b16 %v146
    %v182 = vunpack.c.l.b16 %v147
    %v183 = vunpack.c.l.b16 %v148
    %v184 = vunpack.c.l.b16 %v149
    %v185 = vunpack.c.l.b16 %v150
    %v186 = vunpack.c.l.b16 %v151
    %v187 = vunpack.c.l.b16 %v152
    %v188 = vunpack.c.l.b16 %v153
    %v189 = vpack.c.b16 %v174, %v173
    %v190 = vpack.c.b16 %v176, %v175
    %v191 = vpack.c.b16 %v178, %v177
    %v192 = vpack.c.b16 %v180, %v179
    %v193 = vpack.c.b16 %v182, %v181
    %v194 = vpack.c.b16 %v184, %v183
    %v195 = vpack.c.b16 %v186, %v185
    %v196 = vpack.c.b16 %v188, %v187
    %205 = vmatprep.subr.bf16.mxu0 0
    %206 = vmatpush1.bf16.msra.mxu0 %v189
    %207 = vmatprep.subr.bf16.mxu0 0
    %208 = vmatpush1.bf16.msra.mxu0 %v190
    %209 = vmatprep.subr.bf16.mxu0 0
    %210 = vmatpush1.bf16.msra.mxu0 %v191
    %211 = vmatprep.subr.bf16.mxu0 0
    %212 = vmatpush1.bf16.msra.mxu0 %v192
    %213 = vmatprep.subr.bf16.mxu0 0
    %214 = vmatpush1.bf16.msra.mxu0 %v193
    %215 = vmatprep.subr.bf16.mxu0 0
    %216 = vmatpush1.bf16.msra.mxu0 %v194
    %217 = vmatprep.subr.bf16.mxu0 0
    %218 = vmatpush1.bf16.msra.mxu0 %v195
    %219 = vmatprep.subr.bf16.mxu0 0
    %220 = vmatpush1.bf16.msra.mxu0 %v196
    %221 = vmatprep.subr.bf16.mxu0 0
    %222 = vmatpush1.bf16.msra.mxu0 0
    %223 = vmatprep.subr.bf16.mxu0 0
    %224 = vmatpush1.bf16.msra.mxu0 0
    %225 = vmatprep.subr.bf16.mxu0 0
    %226 = vmatpush1.bf16.msra.mxu0 0
    %227 = vmatprep.subr.bf16.mxu0 0
    %228 = vmatpush1.bf16.msra.mxu0 0
    %229 = vmatprep.subr.bf16.mxu0 0
    %230 = vmatpush1.bf16.msra.mxu0 0
    %231 = vmatprep.subr.bf16.mxu0 0
    %232 = vmatpush1.bf16.msra.mxu0 0
    %233 = vmatprep.subr.bf16.mxu0 0
    %234 = vmatpush1.bf16.msra.mxu0 0
    %235 = vmatprep.subr.bf16.mxu0 0
    %236 = vmatpush1.bf16.msra.mxu0 0
    %237 = vmatprep.mubr.bf16.mxu0 0
    %238 = vmatmul.mubr.bf16.gmra.mrb[0].mxu0 %v156
    %v239 = vpop.f32.mrb[0].mxu0
    %v240 = vadd.f32 %v155, %v239
    %v241 = vpop.f32.mrb[0].mxu0
    %v242 = vpop.f32.mrb[0].mxu0
    %v243 = vpop.f32.mrb[0].mxu0
    %244 = vdwg.mxu0
    %v245 = vmax.f32 %v240, 0.0
    %s246 = scalar_lea.vmem [#allocation2], 128
    %v247 = vld [vmem:[%s246] sm:$0xf]
    %v248 = vld [vmem:[%s246 + $0x4] sm:$0xf]
    %v249 = vld [vmem:[%s246 + $0x8] sm:$0xf]
    %v250 = vld [vmem:[%s246 + $0xc] sm:$0xf]
    %v251 = vld [vmem:[%s246 + $0x10] sm:$0xf]
    %v252 = vld [vmem:[%s246 + $0x14] sm:$0xf]
    %v253 = vld [vmem:[%s246 + $0x18] sm:$0xf]
    %v254 = vld [vmem:[%s246 + $0x1c] sm:$0xf]
    %v255 = vld [vmem:[%s246 + $0x20] sm:$0xf]
    %v256 = vld [vmem:[%s246 + $0x24] sm:$0xf]
    %v257 = vld [vmem:[%s246 + $0x28] sm:$0xf]
    %v258 = vld [vmem:[%s246 + $0x2c] sm:$0xf]
    %v259 = vld [vmem:[%s246 + $0x30] sm:$0xf]
    %v260 = vld [vmem:[%s246 + $0x34] sm:$0xf]
    %v261 = vld [vmem:[%s246 + $0x38] sm:$0xf]
    %v262 = vld [vmem:[%s246 + $0x3c] sm:$0xf]
    %s263 = scalar_lea.vmem %s2, 16
    %v264 = vld [vmem:[%s263] sm:$0xff]
    %v265 = vpack.c.bf16 %v245, %v245
    %v282 = vunpack.c.l.b16 %v247
    %v283 = vunpack.c.l.b16 %v248
    %v284 = vunpack.c.l.b16 %v249
    %v285 = vunpack.c.l.b16 %v250
    %v286 = vunpack.c.l.b16 %v251
    %v287 = vunpack.c.l.b16 %v252
    %v288 = vunpack.c.l.b16 %v253
    %v289 = vunpack.c.l.b16 %v254
    %v290 = vunpack.c.l.b16 %v255
    %v291 = vunpack.c.l.b16 %v256
    %v292 = vunpack.c.l.b16 %v257
    %v293 = vunpack.c.l.b16 %v258
    %v294 = vunpack.c.l.b16 %v259
    %v295 = vunpack.c.l.b16 %v260
    %v296 = vunpack.c.l.b16 %v261
    %v297 = vunpack.c.l.b16 %v262
    %v298 = vpack.c.b16 %v283, %v282
    %v299 = vpack.c.b16 %v285, %v284
    %v300 = vpack.c.b16 %v287, %v286
    %v301 = vpack.c.b16 %v289, %v288
    %v302 = vpack.c.b16 %v291, %v290
    %v303 = vpack.c.b16 %v293, %v292
    %v304 = vpack.c.b16 %v295, %v294
    %v305 = vpack.c.b16 %v297, %v296
    %314 = vmatprep.subr.bf16.mxu0 0
    %315 = vmatpush1.bf16.msra.mxu0 %v298
    %316 = vmatprep.subr.bf16.mxu0 0
    %317 = vmatpush1.bf16.msra.mxu0 %v299
    %318 = vmatprep.subr.bf16.mxu0 0
    %319 = vmatpush1.bf16.msra.mxu0 %v300
    %320 = vmatprep.subr.bf16.mxu0 0
    %321 = vmatpush1.bf16.msra.mxu0 %v301
    %322 = vmatprep.subr.bf16.mxu0 0
    %323 = vmatpush1.bf16.msra.mxu0 %v302
    %324 = vmatprep.subr.bf16.mxu0 0
    %325 = vmatpush1.bf16.msra.mxu0 %v303
    %326 = vmatprep.subr.bf16.mxu0 0
    %327 = vmatpush1.bf16.msra.mxu0 %v304
    %328 = vmatprep.subr.bf16.mxu0 0
    %329 = vmatpush1.bf16.msra.mxu0 %v305
    %330 = vmatprep.subr.bf16.mxu0 0
    %331 = vmatpush1.bf16.msra.mxu0 0
    %332 = vmatprep.subr.bf16.mxu0 0
    %333 = vmatpush1.bf16.msra.mxu0 0
    %334 = vmatprep.subr.bf16.mxu0 0
    %335 = vmatpush1.bf16.msra.mxu0 0
    %336 = vmatprep.subr.bf16.mxu0 0
    %337 = vmatpush1.bf16.msra.mxu0 0
    %338 = vmatprep.subr.bf16.mxu0 0
    %339 = vmatpush1.bf16.msra.mxu0 0
    %340 = vmatprep.subr.bf16.mxu0 0
    %341 = vmatpush1.bf16.msra.mxu0 0
    %342 = vmatprep.subr.bf16.mxu0 0
    %343 = vmatpush1.bf16.msra.mxu0 0
    %344 = vmatprep.subr.bf16.mxu0 0
    %345 = vmatpush1.bf16.msra.mxu0 0
    %346 = vmatprep.mubr.bf16.mxu0 0
    %347 = vmatmul.mubr.bf16.gmra.mrb[0].mxu0 %v265
    %v348 = vpop.f32.mrb[0].mxu0
    %v349 = vadd.f32 %v264, %v348
    %v350 = vpop.f32.mrb[0].mxu0
    %v351 = vpop.f32.mrb[0].mxu0
    %v352 = vpop.f32.mrb[0].mxu0
    %353 = vdwg.mxu0
    %v354 = vmax.f32 %v349, 0.0
    %s355 = scalar_lea.vmem [#allocation2], 192
    %v356 = vld [vmem:[%s355] sm:$0xf]
    %v357 = vld [vmem:[%s355 + $0x4] sm:$0xf]
    %v358 = vld [vmem:[%s355 + $0x8] sm:$0xf]
    %v359 = vld [vmem:[%s355 + $0xc] sm:$0xf]
    %v360 = vld [vmem:[%s355 + $0x10] sm:$0xf]
    %v361 = vld [vmem:[%s355 + $0x14] sm:$0xf]
    %v362 = vld [vmem:[%s355 + $0x18] sm:$0xf]
    %v363 = vld [vmem:[%s355 + $0x1c] sm:$0xf]
    %v364 = vld [vmem:[%s355 + $0x20] sm:$0xf]
    %v365 = vld [vmem:[%s355 + $0x24] sm:$0xf]
    %v366 = vld [vmem:[%s355 + $0x28] sm:$0xf]
    %v367 = vld [vmem:[%s355 + $0x2c] sm:$0xf]
    %v368 = vld [vmem:[%s355 + $0x30] sm:$0xf]
    %v369 = vld [vmem:[%s355 + $0x34] sm:$0xf]
    %v370 = vld [vmem:[%s355 + $0x38] sm:$0xf]
    %v371 = vld [vmem:[%s355 + $0x3c] sm:$0xf]
    %s372 = scalar_lea.vmem %s2, 24
    %v373 = vld [vmem:[%s372] sm:$0xff]
    %v374 = vpack.c.bf16 %v354, %v354
    %v391 = vunpack.c.l.b16 %v356
    %v392 = vunpack.c.l.b16 %v357
    %v393 = vunpack.c.l.b16 %v358
    %v394 = vunpack.c.l.b16 %v359
    %v395 = vunpack.c.l.b16 %v360
    %v396 = vunpack.c.l.b16 %v361
    %v397 = vunpack.c.l.b16 %v362
    %v398 = vunpack.c.l.b16 %v363
    %v399 = vunpack.c.l.b16 %v364
    %v400 = vunpack.c.l.b16 %v365
    %v401 = vunpack.c.l.b16 %v366
    %v402 = vunpack.c.l.b16 %v367
    %v403 = vunpack.c.l.b16 %v368
    %v404 = vunpack.c.l.b16 %v369
    %v405 = vunpack.c.l.b16 %v370
    %v406 = vunpack.c.l.b16 %v371
    %v407 = vpack.c.b16 %v392, %v391
    %v408 = vpack.c.b16 %v394, %v393
    %v409 = vpack.c.b16 %v396, %v395
    %v410 = vpack.c.b16 %v398, %v397
    %v411 = vpack.c.b16 %v400, %v399
    %v412 = vpack.c.b16 %v402, %v401
    %v413 = vpack.c.b16 %v404, %v403
    %v414 = vpack.c.b16 %v406, %v405
    %423 = vmatprep.subr.bf16.mxu0 0
    %424 = vmatpush1.bf16.msra.mxu0 %v407
    %425 = vmatprep.subr.bf16.mxu0 0
    %426 = vmatpush1.bf16.msra.mxu0 %v408
    %427 = vmatprep.subr.bf16.mxu0 0
    %428 = vmatpush1.bf16.msra.mxu0 %v409
    %429 = vmatprep.subr.bf16.mxu0 0
    %430 = vmatpush1.bf16.msra.mxu0 %v410
    %431 = vmatprep.subr.bf16.mxu0 0
    %432 = vmatpush1.bf16.msra.mxu0 %v411
    %433 = vmatprep.subr.bf16.mxu0 0
    %434 = vmatpush1.bf16.msra.mxu0 %v412
    %435 = vmatprep.subr.bf16.mxu0 0
    %436 = vmatpush1.bf16.msra.mxu0 %v413
    %437 = vmatprep.subr.bf16.mxu0 0
    %438 = vmatpush1.bf16.msra.mxu0 %v414
    %439 = vmatprep.subr.bf16.mxu0 0
    %440 = vmatpush1.bf16.msra.mxu0 0
    %441 = vmatprep.subr.bf16.mxu0 0
    %442 = vmatpush1.bf16.msra.mxu0 0
    %443 = vmatprep.subr.bf16.mxu0 0
    %444 = vmatpush1.bf16.msra.mxu0 0
    %445 = vmatprep.subr.bf16.mxu0 0
    %446 = vmatpush1.bf16.msra.mxu0 0
    %447 = vmatprep.subr.bf16.mxu0 0
    %448 = vmatpush1.bf16.msra.mxu0 0
    %449 = vmatprep.subr.bf16.mxu0 0
    %450 = vmatpush1.bf16.msra.mxu0 0
    %451 = vmatprep.subr.bf16.mxu0 0
    %452 = vmatpush1.bf16.msra.mxu0 0
    %453 = vmatprep.subr.bf16.mxu0 0
    %454 = vmatpush1.bf16.msra.mxu0 0
    %455 = vmatprep.mubr.bf16.mxu0 0
    %456 = vmatmul.mubr.bf16.gmra.mrb[0].mxu0 %v374
    %v457 = vpop.f32.mrb[0].mxu0
    %v458 = vadd.f32 %v373, %v457
    %v459 = vpop.f32.mrb[0].mxu0
    %v460 = vpop.f32.mrb[0].mxu0
    %v461 = vpop.f32.mrb[0].mxu0
    %462 = vdwg.mxu0
    %v463 = vmax.f32 %v458, 0.0
    %464 = vst [vmem:[%s3] sm:$0xff] %v463
    // Predicated region
    $region18: #{net_forward.1} parent=1 // pred_check
      _
    $region19: #{net_forward.1} parent=1 // pred_check_branch
      %466 = sbr.rel (0) target = $region21
    $region20: #{net_forward.1} parent=1 // pred_region
      _
    $region21: #{net_forward.1} parent=1 // pred_fallthru
      _
    // Predicated region
    $region22: #{net_forward.1} parent=1 // pred_check
      _
    $region23: #{net_forward.1} parent=1 // pred_check_branch
      %468 = sbr.rel (0) target = $region25
    $region24: #{net_forward.1} parent=1 // pred_region
      _
    $region25: #{net_forward.1} parent=1 // pred_fallthru
      _
    %469 = vsyncpa [#allocation3], 1

</llo_original>
